<compile_context>
chip_gen: v7x
topology: tpu7x:2x2x1
jax: 0.10.0
libtpu: 0.0.40
codegen_flags: <defaults>
</compile_context>

<pallas_src>
import functools
import math

import jax
import jax.numpy as jnp
from jax import lax
from jax.experimental import pallas as pl
from jax.experimental.pallas import tpu as pltpu


def _round_up(x: int, m: int) -> int:
    return ((x + m - 1) // m) * m


def _lora_linear_kernel(x_ref, w_ref, b_ref, xa_ref, bB_ref, o_ref,
                        acc_ref, *, scaling: float):
    """One (i, j, k) grid step of the fused base + LoRA linear.

    x_ref  : (tm, tk)        activation tile
    w_ref  : (tn, tk)        base weight tile, (out, in) layout
    b_ref  : (1, tn)         base bias tile
    xa_ref : (tm, r_pad) f32 precomputed x @ A^T tile (constant across j, k)
    bB_ref : (tn, r_pad)     lora_B tile, (out, r) layout (constant across k)
    o_ref  : (tm, tn)        output tile (constant across k)
    acc_ref: (tm, tn) f32    base-path accumulator (scratch)
    """
    k = pl.program_id(2)

    @pl.when(k == 0)
    def _():
        acc_ref[...] = jnp.zeros_like(acc_ref)

    # Base path: x(tm,tk) . W(tn,tk)^T -> (tm,tn); contract last dim of both
    # (MXU handles the transposed RHS natively; no weight transpose in HBM).
    acc_ref[...] += lax.dot_general(
        x_ref[...], w_ref[...],
        dimension_numbers=(((1,), (1,)), ((), ())),
        preferred_element_type=jnp.float32)

    # Epilogue (once per (i, j) tile): LoRA second matmul + bias + scale.
    @pl.when(k == pl.num_programs(2) - 1)
    def _():
        # xa stays f32 (do not downcast the LoRA intermediate); upcast B.
        lora = lax.dot_general(
            xa_ref[...], bB_ref[...].astype(jnp.float32),
            dimension_numbers=(((1,), (1,)), ((), ())),
            preferred_element_type=jnp.float32)
        out = acc_ref[...] + b_ref[...].astype(jnp.float32) + lora * scaling
        o_ref[...] = out.astype(o_ref.dtype)


def prepare_lora_params(weight, bias, lora_A, lora_B, *,
                        tn: int = 512, tk: int = 1024, param_dtype=None):
    """Pad (and optionally cast) the frozen parameters ONCE, at load time.

    weight: (out, in), bias: (out,), lora_A: (r, in), lora_B: (out, r).
    param_dtype=jnp.bfloat16 is the recommended production configuration.
    """
    out_features, in_features = weight.shape
    r = lora_A.shape[0]

    if param_dtype is not None:
        weight = weight.astype(param_dtype)
        bias = bias.astype(param_dtype)
        lora_A = lora_A.astype(param_dtype)
        lora_B = lora_B.astype(param_dtype)

    # Tile sizes for the N / K axes are a property of the layer, not the call.
    tn = min(tn, _round_up(out_features, 128))
    tk = min(tk, _round_up(in_features, 128))
    n_pad = _round_up(out_features, tn)
    k_pad = _round_up(in_features, tk)
    r_pad = max(_round_up(r, 8), 8)      # sublane-aligned; NOT inflated to 128

    if n_pad == out_features and k_pad == in_features:
        w_p = weight
    else:
        w_p = jnp.pad(weight, ((0, n_pad - out_features),
                               (0, k_pad - in_features)))
    b_p = bias if n_pad == out_features else jnp.pad(
        bias, (0, n_pad - out_features))
    b_p = b_p.reshape(1, n_pad)
    if n_pad == out_features and r_pad == r:
        bB_p = lora_B
    else:
        bB_p = jnp.pad(lora_B, ((0, n_pad - out_features), (0, r_pad - r)))

    return {
        "w": w_p, "b": b_p, "B": bB_p, "A": lora_A,   # A only used in prologue
        "dims": (out_features, in_features, r),
        "tiles": (tn, tk),
        "pads": (n_pad, k_pad, r_pad),
    }


def lora_linear(x, params, scaling, *, tm: int = 512):
    """Eval-mode LoRALinear forward.  x: (..., in_features)."""
    out_features, in_features, r = params["dims"]
    tn, tk = params["tiles"]
    n_pad, k_pad, r_pad = params["pads"]

    lead_shape = x.shape[:-1]
    m = int(math.prod(lead_shape)) if lead_shape else 1
    x2d = x.reshape(m, in_features)
    if x2d.dtype != params["w"].dtype:
        x2d = x2d.astype(params["w"].dtype)
    out_dtype = x2d.dtype

    tm = min(tm, _round_up(m, 8))
    m_pad = _round_up(m, tm)

    # --- LoRA prologue (hoisted out of the kernel grid): xa = x @ A^T -------
    # Tiny (m, r) matmul; done once in plain XLA, f32 accumulation/result.
    xa = lax.dot_general(
        x2d, params["A"],
        dimension_numbers=(((1,), (1,)), ((), ())),
        preferred_element_type=jnp.float32)

    # --- Activation padding (params were padded once at prepare time) -------
    if m_pad == m and k_pad == in_features:
        x_p = x2d
    else:
        x_p = jnp.pad(x2d, ((0, m_pad - m), (0, k_pad - in_features)))
    if m_pad == m and r_pad == r:
        xa_p = xa
    else:
        xa_p = jnp.pad(xa, ((0, m_pad - m), (0, r_pad - r)))

    grid = (m_pad // tm, n_pad // tn, k_pad // tk)

    # VMEM budget: double-buffered inputs + output + f32 accumulator.
    # Raise the scoped limit (v5e default is 16 MiB) but stay well under the
    # v7x 64 MiB per-TC physical ceiling.
    itm = jnp.dtype(x_p.dtype).itemsize
    est = (2 * (tm * tk * itm + tn * tk * itm + tn * itm
                + tm * r_pad * 4 + tn * r_pad * itm)
           + 2 * tm * tn * itm
           + tm * tn * 4)
    vmem_limit = int(min(max(2 * est, 32 << 20), 56 << 20))

    kernel = functools.partial(_lora_linear_kernel, scaling=float(scaling))

    out = pl.pallas_call(
        kernel,
        out_shape=jax.ShapeDtypeStruct((m_pad, n_pad), out_dtype),
        grid_spec=pltpu.PrefetchScalarGridSpec(
            num_scalar_prefetch=0,
            grid=grid,
            in_specs=[
                pl.BlockSpec((tm, tk), lambda i, j, k: (i, k)),      # x
                pl.BlockSpec((tn, tk), lambda i, j, k: (j, k)),      # W (out,in)
                pl.BlockSpec((1, tn), lambda i, j, k: (0, j)),       # bias
                pl.BlockSpec((tm, r_pad), lambda i, j, k: (i, 0)),   # xa = x@A^T
                pl.BlockSpec((tn, r_pad), lambda i, j, k: (j, 0)),   # lora_B
            ],
            out_specs=pl.BlockSpec((tm, tn), lambda i, j, k: (i, j)),
            scratch_shapes=[
                pltpu.VMEM((tm, tn), jnp.float32),   # base-path accumulator
            ],
        ),
        compiler_params=pltpu.CompilerParams(
            dimension_semantics=("parallel", "parallel", "arbitrary"),
            vmem_limit_bytes=vmem_limit),
    )(x_p, params["w"], params["b"], xa_p, params["B"])

    out = out[:m, :out_features]
    return out.reshape(*lead_shape, out_features)


def lora_linear_simple(x, weight, bias, lora_A, lora_B, scaling, **kw):
    """Convenience one-shot wrapper (pads params per call; prefer
    prepare_lora_params + lora_linear in production)."""
    params = prepare_lora_params(weight, bias, lora_A, lora_B)
    return lora_linear(x, params, scaling, **kw)


if __name__ == "__main__":
    # Small shapes consistent with the module's forward:
    # batch=2, seq=8, in_features=32, out_features=32, r=8, lora_alpha=16.
    batch, seq = 2, 8
    in_features, out_features = 32, 32
    r, lora_alpha = 8, 16
    scaling = lora_alpha / r

    key = jax.random.PRNGKey(0)
    kx, kw, kb, ka, kbb = jax.random.split(key, 5)

    x = jax.random.normal(kx, (batch, seq, in_features), dtype=jnp.float32)

    # Deterministic parameter init (shapes from __init__):
    #   base_layer: nn.Linear(in_features, out_features) -> W (out,in), b (out,)
    #   lora_A: (r, in_features) kaiming-uniform-like
    #   lora_B: (out_features, r) -- module inits this to zeros; use small
    #   nonzero values so the LoRA path is actually exercised.
    bound_w = 1.0 / math.sqrt(in_features)
    weight = jax.random.uniform(kw, (out_features, in_features),
                                minval=-bound_w, maxval=bound_w,
                                dtype=jnp.float32)
    bias = jax.random.uniform(kb, (out_features,),
                              minval=-bound_w, maxval=bound_w,
                              dtype=jnp.float32)
    bound_a = math.sqrt(6.0 / in_features)
    lora_A = jax.random.uniform(ka, (r, in_features),
                                minval=-bound_a, maxval=bound_a,
                                dtype=jnp.float32)
    lora_B = 0.01 * jax.random.normal(kbb, (out_features, r), dtype=jnp.float32)

    # Pure-JAX reference (dropout = identity in eval mode), high precision.
    hp = jax.lax.Precision.HIGHEST
    x2 = x.reshape(batch * seq, in_features)
    ref = (jnp.matmul(x2, weight.T, precision=hp) + bias
           + jnp.matmul(jnp.matmul(x2, lora_A.T, precision=hp),
                        lora_B.T, precision=hp) * scaling
           ).reshape(batch, seq, out_features)

    # f32 path: tight correctness check.
    params_f32 = prepare_lora_params(weight, bias, lora_A, lora_B)
    out = jax.block_until_ready(lora_linear(x, params_f32, scaling))
    assert out.shape == (batch, seq, out_features)
    assert jnp.allclose(out, ref, atol=1e-4, rtol=1e-4), "f32 mismatch vs reference"

    # bf16 parameter/activation path (recommended production config: halves
    # HBM weight traffic, 2-3x MXU throughput); looser tolerance.
    params_bf16 = prepare_lora_params(weight, bias, lora_A, lora_B,
                                      param_dtype=jnp.bfloat16)
    out_bf16 = jax.block_until_ready(
        lora_linear(x.astype(jnp.bfloat16), params_bf16, scaling))
    assert out_bf16.shape == (batch, seq, out_features)
    assert jnp.allclose(out_bf16.astype(jnp.float32), ref,
                        atol=5e-2, rtol=5e-2), "bf16 mismatch vs reference"

    print("KERNEL_OK")
</pallas_src>

<mosaic_0001>
module attributes {stable_mosaic.version = 11 : i64} {
  func.func @_lora_linear_kernel(%arg0: i32, %arg1: i32, %arg2: i32, %arg3: memref<16x128xf32, #tpu.memory_space<vmem>>, %arg4: memref<128x128xf32, #tpu.memory_space<vmem>>, %arg5: memref<1x128xf32, #tpu.memory_space<vmem>>, %arg6: memref<16x8xf32, #tpu.memory_space<vmem>>, %arg7: memref<128x8xf32, #tpu.memory_space<vmem>>, %arg8: memref<16x128xf32, #tpu.memory_space<vmem>>, %arg9: memref<16x128xf32, #tpu.memory_space<vmem>>) attributes {dimension_semantics = [#tpu.dimension_semantics<parallel>, #tpu.dimension_semantics<parallel>, #tpu.dimension_semantics<arbitrary>], iteration_bounds = array<i64: 1, 1, 1>, scalar_prefetch = 0 : i64, scratch_operands = 1 : i64, tpu.core_type = #tpu.core_type<tc>, window_params = [{transform_indices = @transform_0, window_bounds = array<i64: 16, 128>}, {transform_indices = @transform_1, window_bounds = array<i64: 128, 128>}, {transform_indices = @transform_2, window_bounds = array<i64: 1, 128>}, {transform_indices = @transform_3, window_bounds = array<i64: 16, 8>}, {transform_indices = @transform_4, window_bounds = array<i64: 128, 8>}, {transform_indices = @transform_5, window_bounds = array<i64: 16, 128>}]} {
    %c0_i32 = arith.constant 0 : i32
    %0 = arith.cmpi eq, %arg2, %c0_i32 : i32
    %1 = arith.extui %0 : i1 to i32
    %c0_i32_0 = arith.constant 0 : i32
    %2 = arith.cmpi ne, %1, %c0_i32_0 : i32
    scf.if %2 {
      %cst_10 = arith.constant 0.000000e+00 : f32
      %12 = vector.broadcast %cst_10 : f32 to vector<16x128xf32>
      %c0_11 = arith.constant 0 : index
      %c0_12 = arith.constant 0 : index
      %13 = vector.load %arg9[%c0_11, %c0_12] : memref<16x128xf32, #tpu.memory_space<vmem>>, vector<16x128xf32>
      tpu.vector_store %arg9[%c0_11, %c0_12], %12 {strides = array<i32>} : memref<16x128xf32, #tpu.memory_space<vmem>>, vector<16x128xf32>,
    } else {
    }
    %c0 = arith.constant 0 : index
    %c0_1 = arith.constant 0 : index
    %3 = vector.load %arg9[%c0, %c0_1] : memref<16x128xf32, #tpu.memory_space<vmem>>, vector<16x128xf32>
    %c0_2 = arith.constant 0 : index
    %c0_3 = arith.constant 0 : index
    %4 = vector.load %arg3[%c0_2, %c0_3] : memref<16x128xf32, #tpu.memory_space<vmem>>, vector<16x128xf32>
    %c0_4 = arith.constant 0 : index
    %c0_5 = arith.constant 0 : index
    %5 = vector.load %arg4[%c0_4, %c0_5] : memref<128x128xf32, #tpu.memory_space<vmem>>, vector<128x128xf32>
    %cst = arith.constant dense<0.000000e+00> : vector<16x128xf32>
    %6 = tpu.matmul %4, %5, %cst {dimension_numbers = #tpu.dot_dimension_numbers<[1], [1], [0], [0], [0, 0, 1, 0], [], []>} : vector<16x128xf32>, vector<128x128xf32>, vector<16x128xf32> -> vector<16x128xf32>
    %7 = arith.addf %3, %6 : vector<16x128xf32>
    %c0_6 = arith.constant 0 : index
    %c0_7 = arith.constant 0 : index
    %8 = vector.load %arg9[%c0_6, %c0_7] : memref<16x128xf32, #tpu.memory_space<vmem>>, vector<16x128xf32>
    tpu.vector_store %arg9[%c0_6, %c0_7], %7 {strides = array<i32>} : memref<16x128xf32, #tpu.memory_space<vmem>>, vector<16x128xf32>,
    %c0_i32_8 = arith.constant 0 : i32
    %9 = arith.cmpi eq, %arg2, %c0_i32_8 : i32
    %10 = arith.extui %9 : i1 to i32
    %c0_i32_9 = arith.constant 0 : i32
    %11 = arith.cmpi ne, %10, %c0_i32_9 : i32
    scf.if %11 {
      %c0_10 = arith.constant 0 : index
      %c0_11 = arith.constant 0 : index
      %12 = vector.load %arg6[%c0_10, %c0_11] : memref<16x8xf32, #tpu.memory_space<vmem>>, vector<16x8xf32>
      %c0_12 = arith.constant 0 : index
      %c0_13 = arith.constant 0 : index
      %13 = vector.load %arg7[%c0_12, %c0_13] : memref<128x8xf32, #tpu.memory_space<vmem>>, vector<128x8xf32>
      %cst_14 = arith.constant dense<0.000000e+00> : vector<16x128xf32>
      %14 = tpu.matmul %12, %13, %cst_14 {dimension_numbers = #tpu.dot_dimension_numbers<[1], [1], [0], [0], [0, 0, 1, 0], [], []>} : vector<16x8xf32>, vector<128x8xf32>, vector<16x128xf32> -> vector<16x128xf32>
      %c0_15 = arith.constant 0 : index
      %c0_16 = arith.constant 0 : index
      %15 = vector.load %arg9[%c0_15, %c0_16] : memref<16x128xf32, #tpu.memory_space<vmem>>, vector<16x128xf32>
      %c0_17 = arith.constant 0 : index
      %c0_18 = arith.constant 0 : index
      %16 = vector.load %arg5[%c0_17, %c0_18] : memref<1x128xf32, #tpu.memory_space<vmem>>, vector<1x128xf32>
      %17 = vector.broadcast %16 : vector<1x128xf32> to vector<16x128xf32>
      %18 = arith.addf %15, %17 : vector<16x128xf32>
      %cst_19 = arith.constant 2.000000e+00 : f32
      %19 = vector.broadcast %cst_19 : f32 to vector<16x128xf32>
      %20 = arith.mulf %14, %19 : vector<16x128xf32>
      %21 = arith.addf %18, %20 : vector<16x128xf32>
      %c0_20 = arith.constant 0 : index
      %c0_21 = arith.constant 0 : index
      %22 = vector.load %arg8[%c0_20, %c0_21] : memref<16x128xf32, #tpu.memory_space<vmem>>, vector<16x128xf32>
      tpu.vector_store %arg8[%c0_20, %c0_21], %21 {strides = array<i32>} : memref<16x128xf32, #tpu.memory_space<vmem>>, vector<16x128xf32>,
    } else {
    }
    return
  }
  func.func @transform_0(%arg0: i32, %arg1: i32, %arg2: i32) -> (i32, i32) {
    %c0_i32 = arith.constant 0 : i32
    return %arg0, %arg2 : i32, i32
  }
  func.func @transform_1(%arg0: i32, %arg1: i32, %arg2: i32) -> (i32, i32) {
    %c0_i32 = arith.constant 0 : i32
    return %arg1, %arg2 : i32, i32
  }
  func.func @transform_2(%arg0: i32, %arg1: i32, %arg2: i32) -> (i32, i32) {
    %c0_i32 = arith.constant 0 : i32
    %c0_i32_0 = arith.constant 0 : i32
    return %c0_i32, %arg1 : i32, i32
  }
  func.func @transform_3(%arg0: i32, %arg1: i32, %arg2: i32) -> (i32, i32) {
    %c0_i32 = arith.constant 0 : i32
    %c0_i32_0 = arith.constant 0 : i32
    return %arg0, %c0_i32 : i32, i32
  }
  func.func @transform_4(%arg0: i32, %arg1: i32, %arg2: i32) -> (i32, i32) {
    %c0_i32 = arith.constant 0 : i32
    %c0_i32_0 = arith.constant 0 : i32
    return %arg1, %c0_i32 : i32, i32
  }
  func.func @transform_5(%arg0: i32, %arg1: i32, %arg2: i32) -> (i32, i32) {
    %c0_i32 = arith.constant 0 : i32
    return %arg0, %arg1 : i32, i32
  }
}

</mosaic_0001>

<llo_original>
// kernel: tpu_custom_call.1
$region0: #{tpu_custom_call.1}
  #allocation0 [shape = 'u32[]', space=smem, size = 0x4, offset = 0x4, fixed_abs, tag = 'smem constant byte address 0x4 - core index']
  #allocation1 [shape = 'u32[144,128]{1,0:T(1,128)}', space=vmem, size = 0x12000, scoped, tag = 'internal scratch']
  #allocation2 [shape = 'f32[16,128]{1,0:T(8,128)}', space=vmem, size = 0x2000, scoped, tag = 'scratch operand']
  %s0 = inlined_call_operand.vmem [shape: f32[16,128], index: 0, kind: input, shape index: {}]
  %s1 = inlined_call_operand.vmem [shape: f32[128,128], index: 1, kind: input, shape index: {}]
  %s2 = inlined_call_operand.vmem [shape: f32[1,128], index: 2, kind: input, shape index: {}]
  %s3 = inlined_call_operand.vmem [shape: f32[16,8], index: 3, kind: input, shape index: {}]
  %s4 = inlined_call_operand.vmem [shape: f32[128,8], index: 4, kind: input, shape index: {}]
  %s5 = inlined_call_operand.hbm [shape: f32[16,128], index: 5, kind: output, shape index: {}]
  %s6 = sld [smem:[#allocation0]]
  $region38: #{tpu_custom_call.1} parent=0
    _
  %s8 = ssub.s32 1, %s6
  %s9 = scalar_select 0, %s8, %s6
  $region1: #{tpu_custom_call.1} parent=0
    #allocation3 [shape = 'u8[8192]{0}', space=vmem, size = 0x2000, scoped, tag = 'output window, operand 0, single buffered']
    #allocation4 [shape = 's32[1]{0}', space=sflag, size = 0x4, scoped, tag = 'scoped memory for tpu_custom_call.1']
    %10 = vsyncpa [#allocation4], 0
    // Predicated region
    $region2: #{tpu_custom_call.1} parent=1 // pred_check
      _
    $region3: #{tpu_custom_call.1} parent=1 // pred_check_branch
      %12 = sbr.rel (0) target = $region5
    $region4: #{tpu_custom_call.1} parent=1 // pred_region
      _
    $region5: #{tpu_custom_call.1} parent=1 // pred_fallthru
      _
    // Predicated region
    $region6: #{tpu_custom_call.1} parent=1 // pred_check
      _
    $region7: #{tpu_custom_call.1} parent=1 // pred_check_branch
      %14 = sbr.rel (0) target = $region9
    $region8: #{tpu_custom_call.1} parent=1 // pred_region
      _
    $region9: #{tpu_custom_call.1} parent=1 // pred_fallthru
      _
    // Predicated region
    $region10: #{tpu_custom_call.1} parent=1 // pred_check
      _
    $region11: #{tpu_custom_call.1} parent=1 // pred_check_branch
      %16 = sbr.rel (0) target = $region13
    $region12: #{tpu_custom_call.1} parent=1 // pred_region
      _
    $region13: #{tpu_custom_call.1} parent=1 // pred_fallthru
      _
    // Predicated region
    $region14: #{tpu_custom_call.1} parent=1 // pred_check
      _
    $region15: #{tpu_custom_call.1} parent=1 // pred_check_branch
      %18 = sbr.rel (0) target = $region17
    $region16: #{tpu_custom_call.1} parent=1 // pred_region
      _
    $region17: #{tpu_custom_call.1} parent=1 // pred_fallthru
      _
    // Predicated region
    $region18: #{tpu_custom_call.1} parent=1 // pred_check
      _
    $region19: #{tpu_custom_call.1} parent=1 // pred_check_branch
      %20 = sbr.rel (0) target = $region21
    $region20: #{tpu_custom_call.1} parent=1 // pred_region
      _
    $region21: #{tpu_custom_call.1} parent=1 // pred_fallthru
      _
    %p21 = scmp.eq.s32.totalorder 0, 0
    // Predicated region
    $region22: #{tpu_custom_call.1} parent=1 // pred_check
      %p22 = pneg %p21
    $region23: #{tpu_custom_call.1} parent=1 // pred_check_branch
      %24 = sbr.rel (%p22) target = $region25
    $region24: #{tpu_custom_call.1} parent=1 // pred_region
      %25 = vst [vmem:[#allocation2] sm:$0xff] 0.0
      %26 = vst [vmem:[#allocation2 + $0x8] sm:$0xff] 0.0
    $region25: #{tpu_custom_call.1} parent=1 // pred_fallthru
      _
    %v27 = vld [vmem:[#allocation2] sm:$0xff]
    %v28 = vld [vmem:[#allocation2 + $0x8] sm:$0xff]
    %v29 = vld [vmem:[%s0] sm:$0xff]
    %v30 = vld [vmem:[%s0 + $0x8] sm:$0xff]
    %v31 = vld [vmem:[%s1] sm:$0xff]
    %v32 = vld [vmem:[%s1 + $0x8] sm:$0xff]
    %v33 = vld [vmem:[%s1 + $0x10] sm:$0xff]
    %v34 = vld [vmem:[%s1 + $0x18] sm:$0xff]
    %v35 = vld [vmem:[%s1 + $0x20] sm:$0xff]
    %v36 = vld [vmem:[%s1 + $0x28] sm:$0xff]
    %v37 = vld [vmem:[%s1 + $0x30] sm:$0xff]
    %v38 = vld [vmem:[%s1 + $0x38] sm:$0xff]
    %v39 = vld [vmem:[%s1 + $0x40] sm:$0xff]
    %v40 = vld [vmem:[%s1 + $0x48] sm:$0xff]
    %v41 = vld [vmem:[%s1 + $0x50] sm:$0xff]
    %v42 = vld [vmem:[%s1 + $0x58] sm:$0xff]
    %v43 = vld [vmem:[%s1 + $0x60] sm:$0xff]
    %v44 = vld [vmem:[%s1 + $0x68] sm:$0xff]
    %v45 = vld [vmem:[%s1 + $0x70] sm:$0xff]
    %v46 = vld [vmem:[%s1 + $0x78] sm:$0xff]
    %47 = vmatprep.subr.mxu0 0.0
    %48 = vmatpush1.xpose.msra.mxu0 %v31
    %49 = vmatprep.subr.mxu0 0.0
    %50 = vmatpush1.xpose.msra.mxu0 %v32
    %51 = vmatprep.subr.mxu0 0.0
    %52 = vmatpush1.xpose.msra.mxu0 %v33
    %53 = vmatprep.subr.mxu0 0.0
    %54 = vmatpush1.xpose.msra.mxu0 %v34
    %55 = vmatprep.subr.mxu0 0.0
    %56 = vmatpush1.xpose.msra.mxu0 %v35
    %57 = vmatprep.subr.mxu0 0.0
    %58 = vmatpush1.xpose.msra.mxu0 %v36
    %59 = vmatprep.subr.mxu0 0.0
    %60 = vmatpush1.xpose.msra.mxu0 %v37
    %61 = vmatprep.subr.mxu0 0.0
    %62 = vmatpush1.xpose.msra.mxu0 %v38
    %63 = vmatprep.subr.mxu0 0.0
    %64 = vmatpush1.xpose.msra.mxu0 %v39
    %65 = vmatprep.subr.mxu0 0.0
    %66 = vmatpush1.xpose.msra.mxu0 %v40
    %67 = vmatprep.subr.mxu0 0.0
    %68 = vmatpush1.xpose.msra.mxu0 %v41
    %69 = vmatprep.subr.mxu0 0.0
    %70 = vmatpush1.xpose.msra.mxu0 %v42
    %71 = vmatprep.subr.mxu0 0.0
    %72 = vmatpush1.xpose.msra.mxu0 %v43
    %73 = vmatprep.subr.mxu0 0.0
    %74 = vmatpush1.xpose.msra.mxu0 %v44
    %75 = vmatprep.subr.mxu0 0.0
    %76 = vmatpush1.xpose.msra.mxu0 %v45
    %77 = vmatprep.subr.mxu0 0.0
    %78 = vmatpush1.xpose.msra.mxu0 %v46
    %79 = vmatprep.subr.mxu0 0.0
    %80 = vmatpush1.xpose.msra.mxu0 0.0
    %81 = vmatprep.subr.mxu0 0.0
    %82 = vmatpush1.xpose.msra.mxu0 0.0
    %83 = vmatprep.subr.mxu0 0.0
    %84 = vmatpush1.xpose.msra.mxu0 0.0
    %85 = vmatprep.subr.mxu0 0.0
    %86 = vmatpush1.xpose.msra.mxu0 0.0
    %87 = vmatprep.subr.mxu0 0.0
    %88 = vmatpush1.xpose.msra.mxu0 0.0
    %89 = vmatprep.subr.mxu0 0.0
    %90 = vmatpush1.xpose.msra.mxu0 0.0
    %91 = vmatprep.subr.mxu0 0.0
    %92 = vmatpush1.xpose.msra.mxu0 0.0
    %93 = vmatprep.subr.mxu0 0.0
    %94 = vmatpush1.xpose.msra.mxu0 0.0
    %95 = vmatprep.subr.mxu0 0.0
    %96 = vmatpush1.xpose.msra.mxu0 0.0
    %97 = vmatprep.subr.mxu0 0.0
    %98 = vmatpush1.xpose.msra.mxu0 0.0
    %99 = vmatprep.subr.mxu0 0.0
    %100 = vmatpush1.xpose.msra.mxu0 0.0
    %101 = vmatprep.subr.mxu0 0.0
    %102 = vmatpush1.xpose.msra.mxu0 0.0
    %103 = vmatprep.subr.mxu0 0.0
    %104 = vmatpush1.xpose.msra.mxu0 0.0
    %105 = vmatprep.subr.mxu0 0.0
    %106 = vmatpush1.xpose.msra.mxu0 0.0
    %107 = vmatprep.subr.mxu0 0.0
    %108 = vmatpush1.xpose.msra.mxu0 0.0
    %109 = vmatprep.subr.mxu0 0.0
    %110 = vmatpush1.xpose.msra.mxu0 0.0
    %111 = vmatprep.mubr.f32.mxu0 0.0
    %112 = vmatmul.mubr.f32.gmra.mrb[0].mxu0 %v29
    %v113 = vpop.f32.mrb[0].mxu0
    %v114 = vadd.f32 0.0, %v113
    %v115 = vpop.f32.mrb[0].mxu0
    %116 = vmatprep.mubr.f32.mxu0 0.0
    %117 = vmatmul.mubr.f32.gmra.mrb[0].mxu0 %v30
    %v118 = vpop.f32.mrb[0].mxu0
    %v119 = vadd.f32 0.0, %v118
    %v120 = vpop.f32.mrb[0].mxu0
    %121 = vdwg.mxu0
    %v122 = vadd.f32 %v27, %v114
    %v123 = vadd.f32 %v28, %v119
    %124 = vst [vmem:[#allocation2] sm:$0xff] %v122
    %125 = vst [vmem:[#allocation2 + $0x8] sm:$0xff] %v123
    // Predicated region
    $region26: #{tpu_custom_call.1} parent=1 // pred_check
      %p126 = pneg %p21
    $region27: #{tpu_custom_call.1} parent=1 // pred_check_branch
      %128 = sbr.rel (%p126) target = $region29
    $region28: #{tpu_custom_call.1} parent=1 // pred_region
      %v129 = vld [vmem:[%s3] sm:$0xff]
      %v130 = vld [vmem:[%s3 + $0x8] sm:$0xff]
      %v131 = vld [vmem:[%s4] sm:$0xff]
      %v132 = vld [vmem:[%s4 + $0x8] sm:$0xff]
      %v133 = vld [vmem:[%s4 + $0x10] sm:$0xff]
      %v134 = vld [vmem:[%s4 + $0x18] sm:$0xff]
      %v135 = vld [vmem:[%s4 + $0x20] sm:$0xff]
      %v136 = vld [vmem:[%s4 + $0x28] sm:$0xff]
      %v137 = vld [vmem:[%s4 + $0x30] sm:$0xff]
      %v138 = vld [vmem:[%s4 + $0x38] sm:$0xff]
      %v139 = vld [vmem:[%s4 + $0x40] sm:$0xff]
      %v140 = vld [vmem:[%s4 + $0x48] sm:$0xff]
      %v141 = vld [vmem:[%s4 + $0x50] sm:$0xff]
      %v142 = vld [vmem:[%s4 + $0x58] sm:$0xff]
      %v143 = vld [vmem:[%s4 + $0x60] sm:$0xff]
      %v144 = vld [vmem:[%s4 + $0x68] sm:$0xff]
      %v145 = vld [vmem:[%s4 + $0x70] sm:$0xff]
      %v146 = vld [vmem:[%s4 + $0x78] sm:$0xff]
      %vm147 = vcmask 64512
      %v149 = vsel %vm147, %v129, 0
      %v152 = vsel %vm147, %v130, 0
      %v155 = vsel %vm147, %v131, 0
      %v158 = vsel %vm147, %v132, 0
      %v161 = vsel %vm147, %v133, 0
      %v164 = vsel %vm147, %v134, 0
      %v167 = vsel %vm147, %v135, 0
      %v170 = vsel %vm147, %v136, 0
      %v173 = vsel %vm147, %v137, 0
      %v176 = vsel %vm147, %v138, 0
      %v179 = vsel %vm147, %v139, 0
      %v182 = vsel %vm147, %v140, 0
      %v185 = vsel %vm147, %v141, 0
      %v188 = vsel %vm147, %v142, 0
      %v191 = vsel %vm147, %v143, 0
      %v194 = vsel %vm147, %v144, 0
      %v197 = vsel %vm147, %v145, 0
      %v200 = vsel %vm147, %v146, 0
      %202 = vmatprep.subr.mxu0 0.0
      %203 = vmatpush1.xpose.msra.mxu0 %v155
      %204 = vmatprep.subr.mxu0 0.0
      %205 = vmatpush1.xpose.msra.mxu0 %v158
      %206 = vmatprep.subr.mxu0 0.0
      %207 = vmatpush1.xpose.msra.mxu0 %v161
      %208 = vmatprep.subr.mxu0 0.0
      %209 = vmatpush1.xpose.msra.mxu0 %v164
      %210 = vmatprep.subr.mxu0 0.0
      %211 = vmatpush1.xpose.msra.mxu0 %v167
      %212 = vmatprep.subr.mxu0 0.0
      %213 = vmatpush1.xpose.msra.mxu0 %v170
      %214 = vmatprep.subr.mxu0 0.0
      %215 = vmatpush1.xpose.msra.mxu0 %v173
      %216 = vmatprep.subr.mxu0 0.0
      %217 = vmatpush1.xpose.msra.mxu0 %v176
      %218 = vmatprep.subr.mxu0 0.0
      %219 = vmatpush1.xpose.msra.mxu0 %v179
      %220 = vmatprep.subr.mxu0 0.0
      %221 = vmatpush1.xpose.msra.mxu0 %v182
      %222 = vmatprep.subr.mxu0 0.0
      %223 = vmatpush1.xpose.msra.mxu0 %v185
      %224 = vmatprep.subr.mxu0 0.0
      %225 = vmatpush1.xpose.msra.mxu0 %v188
      %226 = vmatprep.subr.mxu0 0.0
      %227 = vmatpush1.xpose.msra.mxu0 %v191
      %228 = vmatprep.subr.mxu0 0.0
      %229 = vmatpush1.xpose.msra.mxu0 %v194
      %230 = vmatprep.subr.mxu0 0.0
      %231 = vmatpush1.xpose.msra.mxu0 %v197
      %232 = vmatprep.subr.mxu0 0.0
      %233 = vmatpush1.xpose.msra.mxu0 %v200
      %234 = vmatprep.subr.mxu0 0.0
      %235 = vmatpush1.xpose.msra.mxu0 0.0
      %236 = vmatprep.subr.mxu0 0.0
      %237 = vmatpush1.xpose.msra.mxu0 0.0
      %238 = vmatprep.subr.mxu0 0.0
      %239 = vmatpush1.xpose.msra.mxu0 0.0
      %240 = vmatprep.subr.mxu0 0.0
      %241 = vmatpush1.xpose.msra.mxu0 0.0
      %242 = vmatprep.subr.mxu0 0.0
      %243 = vmatpush1.xpose.msra.mxu0 0.0
      %244 = vmatprep.subr.mxu0 0.0
      %245 = vmatpush1.xpose.msra.mxu0 0.0
      %246 = vmatprep.subr.mxu0 0.0
      %247 = vmatpush1.xpose.msra.mxu0 0.0
      %248 = vmatprep.subr.mxu0 0.0
      %249 = vmatpush1.xpose.msra.mxu0 0.0
      %250 = vmatprep.subr.mxu0 0.0
      %251 = vmatpush1.xpose.msra.mxu0 0.0
      %252 = vmatprep.subr.mxu0 0.0
      %253 = vmatpush1.xpose.msra.mxu0 0.0
      %254 = vmatprep.subr.mxu0 0.0
      %255 = vmatpush1.xpose.msra.mxu0 0.0
      %256 = vmatprep.subr.mxu0 0.0
      %257 = vmatpush1.xpose.msra.mxu0 0.0
      %258 = vmatprep.subr.mxu0 0.0
      %259 = vmatpush1.xpose.msra.mxu0 0.0
      %260 = vmatprep.subr.mxu0 0.0
      %261 = vmatpush1.xpose.msra.mxu0 0.0
      %262 = vmatprep.subr.mxu0 0.0
      %263 = vmatpush1.xpose.msra.mxu0 0.0
      %264 = vmatprep.subr.mxu0 0.0
      %265 = vmatpush1.xpose.msra.mxu0 0.0
      %266 = vmatprep.mubr.f32.mxu0 0.0
      %267 = vmatmul.mubr.f32.gmra.mrb[0].mxu0 %v149
      %v268 = vpop.f32.mrb[0].mxu0
      %v269 = vadd.f32 0.0, %v268
      %v270 = vpop.f32.mrb[0].mxu0
      %271 = vmatprep.mubr.f32.mxu0 0.0
      %272 = vmatmul.mubr.f32.gmra.mrb[0].mxu0 %v152
      %v273 = vpop.f32.mrb[0].mxu0
      %v274 = vadd.f32 0.0, %v273
      %v275 = vpop.f32.mrb[0].mxu0
      %276 = vdwg.mxu0
      %v277 = vld [vmem:[#allocation2] sm:$0xff]
      %v278 = vld [vmem:[#allocation2 + $0x8] sm:$0xff]
      %v279 = vld [vmem:[%s2] sm:$0x1]
      %v281 = vlaneseq
      %v282 = vshrl.u32 %v281, 7
      %v283 = vsub.s32 0, %v282
      %v284 = vrot.slane %v279, %v283
      %v286 = vadd.f32 %v277, %v284
      %v287 = vadd.f32 %v278, %v284
      %v288 = vmul.f32 %v269, 2.0
      %v289 = vmul.f32 %v274, 2.0
      %v290 = vadd.f32 %v286, %v288
      %v291 = vadd.f32 %v287, %v289
      %292 = vst [vmem:[#allocation3] sm:$0xff] %v290
      %293 = vst [vmem:[#allocation3 + $0x8] sm:$0xff] %v291
    $region29: #{tpu_custom_call.1} parent=1 // pred_fallthru
      _
    // Predicated region
    $region30: #{tpu_custom_call.1} parent=1 // pred_check
      _
    $region31: #{tpu_custom_call.1} parent=1 // pred_check_branch
      %295 = sbr.rel (0) target = $region33
    $region32: #{tpu_custom_call.1} parent=1 // pred_region
      %s297 = ssub.s32 256, 256
      %298 = vsyncadd [#allocation4], %s297
      %s299 = sshll.u32 [#allocation3], 4
      %s300 = int_to_ptr.vmem [resolvable:$true] %s299
      %305 = dma.vmem_to_hbm [thread:$0]  %s300, 256, %s5, [#allocation4], 128, 128, 8
    $region33: #{tpu_custom_call.1} parent=1 // pred_fallthru
      _
    // Predicated region
    $region34: #{tpu_custom_call.1} parent=1 // pred_check
      _
    $region35: #{tpu_custom_call.1} parent=1 // pred_check_branch
      %307 = sbr.rel (0) target = $region37
    $region36: #{tpu_custom_call.1} parent=1 // pred_region
      %308 = dma.done [#allocation4], 256
    $region37: #{tpu_custom_call.1} parent=1 // pred_fallthru
      _
    %309 = vsyncpa [#allocation4], 1

</llo_original>
